<compile_context>
chip_gen: v7x
topology: tpu7x:2x2x1
jax: 0.10.0
libtpu: 0.0.40
codegen_flags: <defaults>
</compile_context>

<pallas_src>
import jax
import jax.numpy as jnp
from jax.experimental import pallas as pl
from jax.experimental.pallas import tpu as pltpu


def _gelu_tanh(x):
    # tanh-approximation GELU (maps onto the EUP tanh slot).
    # TODO(synk): PyTorch nn.GELU default is the exact erf form; tanh approx is
    # used here for guaranteed Mosaic lowering (~1e-3 element error).
    c = jnp.float32(0.7978845608028654)  # sqrt(2/pi)
    return 0.5 * x * (1.0 + jnp.tanh(c * (x + 0.044715 * x * x * x)))


def residual_mlp_kernel(x_ref, w1_ref, b1_ref, w2_ref, b2_ref, o_ref):
    x = x_ref[...]                                       # (tm, D) native dtype, read once
    # Matmul 1: cast activations only at the MXU boundary; accumulate in f32.
    h = jnp.dot(x.astype(w1_ref.dtype), w1_ref[...],
                preferred_element_type=jnp.float32)      # (tm, H) f32
    h = _gelu_tanh(h + b1_ref[...])                      # f32 elementwise (v5e-safe)
    # Matmul 2: bf16 into the MXU, f32 accumulation.
    y = jnp.dot(h.astype(w2_ref.dtype), w2_ref[...],
                preferred_element_type=jnp.float32)      # (tm, D) f32
    # Fused epilogue: bias + residual add + output cast in one VPU pass.
    o_ref[...] = (y + b2_ref[...] + x.astype(jnp.float32)).astype(o_ref.dtype)


def _round_up(x, m):
    return (x + m - 1) // m * m


def residual_mlp(x, w1, b1, w2, b2, *, tm=1024,
                 vmem_limit_bytes=32 * 1024 * 1024):
    """out = fn(x) + x with fn = Linear -> GELU -> Linear.

    x:  (B, N, D)
    w1: (D, H), b1: (1, H), w2: (H, D), b2: (1, D)
    Weights should already be in the desired MXU dtype (e.g. bf16) — cast once
    at init, not per forward call. Biases stay f32 (epilogue is f32).
    """
    B, N, D = x.shape
    H = w1.shape[1]
    R = B * N

    # Cap tm only by the (8-row aligned) token count; no host-side padding —
    # the ragged last block is handled by Pallas (masked OOB stores).
    tm = max(8, min(tm, _round_up(R, 8)))
    grid = pl.cdiv(R, tm)

    x2 = x.reshape(R, D)

    # Advisory cost estimate: two (R, D/H) x (D/H, H/D) matmuls + tanh GELU.
    cost = pl.CostEstimate(
        flops=4 * R * D * H,
        transcendentals=R * H,
        bytes_accessed=(2 * R * D * x.dtype.itemsize        # x in, out
                        + w1.size * w1.dtype.itemsize
                        + w2.size * w2.dtype.itemsize
                        + b1.size * b1.dtype.itemsize
                        + b2.size * b2.dtype.itemsize),
    )

    out = pl.pallas_call(
        residual_mlp_kernel,
        out_shape=jax.ShapeDtypeStruct((R, D), x.dtype),
        grid_spec=pltpu.PrefetchScalarGridSpec(
            num_scalar_prefetch=0,
            grid=(grid,),
            in_specs=[
                pl.BlockSpec((tm, D), lambda i: (i, 0)),   # x token tile (streamed)
                pl.BlockSpec((D, H), lambda i: (0, 0)),    # W1 (resident)
                pl.BlockSpec((1, H), lambda i: (0, 0)),    # b1 (resident)
                pl.BlockSpec((H, D), lambda i: (0, 0)),    # W2 (resident)
                pl.BlockSpec((1, D), lambda i: (0, 0)),    # b2 (resident)
            ],
            out_specs=pl.BlockSpec((tm, D), lambda i: (i, 0)),
        ),
        compiler_params=pltpu.CompilerParams(
            dimension_semantics=("parallel",),             # megacore-shardable rows
            vmem_limit_bytes=vmem_limit_bytes),
        cost_estimate=cost,
    )(x2, w1, b1, w2, b2)

    return out.reshape(B, N, D)


def reference(x, w1, b1, w2, b2):
    # Pure-JAX reference applying the same MXU-boundary casts as the kernel.
    h = jnp.einsum("bnd,dh->bnh", x.astype(w1.dtype), w1,
                   preferred_element_type=jnp.float32) + b1[0]
    h = _gelu_tanh(h)
    y = jnp.einsum("bnh,hd->bnd", h.astype(w2.dtype), w2,
                   preferred_element_type=jnp.float32) + b2[0]
    return (y + x.astype(jnp.float32)).astype(x.dtype)


if __name__ == "__main__":
    # Small but lane-dense shapes: D and H multiples of 128 so stores are
    # unmasked vst and the MXU contraction dims are full-width.
    B, N, D, H = 2, 8, 128, 256

    key = jax.random.PRNGKey(0)
    kx, k1, k2, k3, k4 = jax.random.split(key, 5)

    x = jax.random.normal(kx, (B, N, D), dtype=jnp.float32)
    w1 = jax.random.normal(k1, (D, H), dtype=jnp.float32) * (1.0 / jnp.sqrt(D))
    b1 = jax.random.normal(k2, (1, H), dtype=jnp.float32) * 0.01
    w2 = jax.random.normal(k3, (H, D), dtype=jnp.float32) * (1.0 / jnp.sqrt(H))
    b2 = jax.random.normal(k4, (1, D), dtype=jnp.float32) * 0.01

    # One-time (init-style) weight cast to the MXU dtype — hoisted out of the
    # forward wrapper so repeated calls don't re-emit cast ops.
    w1_mxu = w1.astype(jnp.bfloat16)
    w2_mxu = w2.astype(jnp.bfloat16)

    out = residual_mlp(x, w1_mxu, b1, w2_mxu, b2)
    out = jax.block_until_ready(out)

    ref = reference(x, w1_mxu, b1, w2_mxu, b2)
    assert out.shape == x.shape and out.dtype == x.dtype
    # Tolerance sized for bf16 MXU inputs / f32 accumulation (K up to 256).
    assert jnp.allclose(out, ref, atol=1e-2, rtol=1e-2), "mismatch vs reference"

    print("KERNEL_OK")
</pallas_src>

<mosaic_0001>
module attributes {stable_mosaic.version = 11 : i64} {
  func.func @residual_mlp_kernel(%arg0: i32, %arg1: memref<16x128xf32, #tpu.memory_space<vmem>>, %arg2: memref<128x256xbf16, #tpu.memory_space<vmem>>, %arg3: memref<1x256xf32, #tpu.memory_space<vmem>>, %arg4: memref<256x128xbf16, #tpu.memory_space<vmem>>, %arg5: memref<1x128xf32, #tpu.memory_space<vmem>>, %arg6: memref<16x128xf32, #tpu.memory_space<vmem>>) attributes {dimension_semantics = [#tpu.dimension_semantics<parallel>], iteration_bounds = array<i64: 1>, scalar_prefetch = 0 : i64, scratch_operands = 0 : i64, tpu.core_type = #tpu.core_type<tc>, window_params = [{transform_indices = @transform_0, window_bounds = array<i64: 16, 128>}, {pipeline_mode = #tpu.pipeline_mode<synchronous>, transform_indices = @transform_1, window_bounds = array<i64: 128, 256>}, {pipeline_mode = #tpu.pipeline_mode<synchronous>, transform_indices = @transform_2, window_bounds = array<i64: 1, 256>}, {pipeline_mode = #tpu.pipeline_mode<synchronous>, transform_indices = @transform_3, window_bounds = array<i64: 256, 128>}, {pipeline_mode = #tpu.pipeline_mode<synchronous>, transform_indices = @transform_4, window_bounds = array<i64: 1, 128>}, {transform_indices = @transform_5, window_bounds = array<i64: 16, 128>}]} {
    %c0 = arith.constant 0 : index
    %c0_0 = arith.constant 0 : index
    %0 = vector.load %arg1[%c0, %c0_0] : memref<16x128xf32, #tpu.memory_space<vmem>>, vector<16x128xf32>
    %1 = arith.truncf %0 : vector<16x128xf32> to vector<16x128xbf16>
    %c0_1 = arith.constant 0 : index
    %c0_2 = arith.constant 0 : index
    %2 = vector.load %arg2[%c0_1, %c0_2] : memref<128x256xbf16, #tpu.memory_space<vmem>>, vector<128x256xbf16>
    %cst = arith.constant dense<0.000000e+00> : vector<16x256xf32>
    %3 = tpu.matmul %1, %2, %cst {dimension_numbers = #tpu.dot_dimension_numbers<[1], [0], [0], [1], [0, 0, 1, 1], [], []>} : vector<16x128xbf16>, vector<128x256xbf16>, vector<16x256xf32> -> vector<16x256xf32>
    %c0_3 = arith.constant 0 : index
    %c0_4 = arith.constant 0 : index
    %4 = vector.load %arg3[%c0_3, %c0_4] : memref<1x256xf32, #tpu.memory_space<vmem>>, vector<1x256xf32>
    %5 = vector.broadcast %4 : vector<1x256xf32> to vector<16x256xf32>
    %6 = arith.addf %3, %5 : vector<16x256xf32>
    %cst_5 = arith.constant 5.000000e-01 : f32
    %7 = vector.broadcast %cst_5 : f32 to vector<16x256xf32>
    %8 = arith.mulf %7, %6 : vector<16x256xf32>
    %cst_6 = arith.constant 4.471500e-02 : f32
    %9 = vector.broadcast %cst_6 : f32 to vector<16x256xf32>
    %10 = arith.mulf %9, %6 : vector<16x256xf32>
    %11 = arith.mulf %10, %6 : vector<16x256xf32>
    %12 = arith.mulf %11, %6 : vector<16x256xf32>
    %13 = arith.addf %6, %12 : vector<16x256xf32>
    %cst_7 = arith.constant 0.797884583 : f32
    %14 = vector.broadcast %cst_7 : f32 to vector<16x256xf32>
    %15 = arith.mulf %14, %13 : vector<16x256xf32>
    %16 = math.tanh %15 : vector<16x256xf32>
    %cst_8 = arith.constant 1.000000e+00 : f32
    %17 = vector.broadcast %cst_8 : f32 to vector<16x256xf32>
    %18 = arith.addf %17, %16 : vector<16x256xf32>
    %19 = arith.mulf %8, %18 : vector<16x256xf32>
    %20 = arith.truncf %19 : vector<16x256xf32> to vector<16x256xbf16>
    %c0_9 = arith.constant 0 : index
    %c0_10 = arith.constant 0 : index
    %21 = vector.load %arg4[%c0_9, %c0_10] : memref<256x128xbf16, #tpu.memory_space<vmem>>, vector<256x128xbf16>
    %cst_11 = arith.constant dense<0.000000e+00> : vector<16x128xf32>
    %22 = tpu.matmul %20, %21, %cst_11 {dimension_numbers = #tpu.dot_dimension_numbers<[1], [0], [0], [1], [0, 0, 1, 1], [], []>} : vector<16x256xbf16>, vector<256x128xbf16>, vector<16x128xf32> -> vector<16x128xf32>
    %c0_12 = arith.constant 0 : index
    %c0_13 = arith.constant 0 : index
    %23 = vector.load %arg5[%c0_12, %c0_13] : memref<1x128xf32, #tpu.memory_space<vmem>>, vector<1x128xf32>
    %24 = vector.broadcast %23 : vector<1x128xf32> to vector<16x128xf32>
    %25 = arith.addf %22, %24 : vector<16x128xf32>
    %26 = arith.addf %25, %0 : vector<16x128xf32>
    %c0_14 = arith.constant 0 : index
    %c0_15 = arith.constant 0 : index
    %27 = vector.load %arg6[%c0_14, %c0_15] : memref<16x128xf32, #tpu.memory_space<vmem>>, vector<16x128xf32>
    tpu.vector_store %arg6[%c0_14, %c0_15], %26 {strides = array<i32>} : memref<16x128xf32, #tpu.memory_space<vmem>>, vector<16x128xf32>,
    return
  }
  func.func @transform_0(%arg0: i32) -> (i32, i32) {
    %c0_i32 = arith.constant 0 : i32
    %c0_i32_0 = arith.constant 0 : i32
    return %arg0, %c0_i32 : i32, i32
  }
  func.func @transform_1(%arg0: i32) -> (i32, i32) {
    %c0_i32 = arith.constant 0 : i32
    %c0_i32_0 = arith.constant 0 : i32
    %c0_i32_1 = arith.constant 0 : i32
    return %c0_i32, %c0_i32_0 : i32, i32
  }
  func.func @transform_2(%arg0: i32) -> (i32, i32) {
    %c0_i32 = arith.constant 0 : i32
    %c0_i32_0 = arith.constant 0 : i32
    %c0_i32_1 = arith.constant 0 : i32
    return %c0_i32, %c0_i32_0 : i32, i32
  }
  func.func @transform_3(%arg0: i32) -> (i32, i32) {
    %c0_i32 = arith.constant 0 : i32
    %c0_i32_0 = arith.constant 0 : i32
    %c0_i32_1 = arith.constant 0 : i32
    return %c0_i32, %c0_i32_0 : i32, i32
  }
  func.func @transform_4(%arg0: i32) -> (i32, i32) {
    %c0_i32 = arith.constant 0 : i32
    %c0_i32_0 = arith.constant 0 : i32
    %c0_i32_1 = arith.constant 0 : i32
    return %c0_i32, %c0_i32_0 : i32, i32
  }
  func.func @transform_5(%arg0: i32) -> (i32, i32) {
    %c0_i32 = arith.constant 0 : i32
    %c0_i32_0 = arith.constant 0 : i32
    return %arg0, %c0_i32 : i32, i32
  }
}

</mosaic_0001>

<llo_original>
// kernel: tpu_custom_call.1
$region0: #{tpu_custom_call.1}
  #allocation0 [shape = 'u32[]', space=smem, size = 0x4, offset = 0x4, fixed_abs, tag = 'smem constant byte address 0x4 - core index']
  #allocation1 [shape = 'u32[144,128]{1,0:T(1,128)}', space=vmem, size = 0x12000, scoped, tag = 'internal scratch']
  %s0 = inlined_call_operand.hbm [shape: f32[16,128], index: 0, kind: input, shape index: {}]
  %s1 = inlined_call_operand.hbm [shape: bf16[128,256], index: 1, kind: input, shape index: {}]
  %s2 = inlined_call_operand.vmem [shape: f32[1,256], index: 2, kind: input, shape index: {}]
  %s3 = inlined_call_operand.hbm [shape: bf16[256,128], index: 3, kind: input, shape index: {}]
  %s4 = inlined_call_operand.vmem [shape: f32[1,128], index: 4, kind: input, shape index: {}]
  %s5 = inlined_call_operand.hbm [shape: f32[16,128], index: 5, kind: output, shape index: {}]
  %s6 = sld [smem:[#allocation0]]
  $region42: #{tpu_custom_call.1} parent=0
    _
  %s8 = ssub.s32 1, %s6
  %s9 = scalar_select 0, %s8, %s6
  $region1: #{tpu_custom_call.1} parent=0
    #allocation2 [shape = 'u8[8192]{0}', space=vmem, size = 0x2000, scoped, tag = 'input window, operand 0, single buffered']
    #allocation3 [shape = 's32[1]{0}', space=sflag, size = 0x4, scoped, tag = 'scoped memory for tpu_custom_call.1']
    #allocation4 [shape = 's32[1]{0}', space=sflag, size = 0x4, scoped, tag = 'scoped memory for tpu_custom_call.1']
    #allocation5 [shape = 'u8[65536]{0}', space=vmem, size = 0x10000, scoped, tag = 'input window, operand 1, single buffered']
    #allocation6 [shape = 's32[1]{0}', space=sflag, size = 0x4, scoped, tag = 'scoped memory for tpu_custom_call.1']
    #allocation7 [shape = 'u8[65536]{0}', space=vmem, size = 0x10000, scoped, tag = 'input window, operand 3, single buffered']
    #allocation8 [shape = 'u8[8192]{0}', space=vmem, size = 0x2000, scoped, tag = 'output window, operand 0, single buffered']
    %10 = vsyncpa [#allocation3], 0
    %11 = vsyncpa [#allocation6], 0
    %12 = vsyncpa [#allocation4], 0
    // Predicated region
    $region2: #{tpu_custom_call.1} parent=1 // pred_check
      _
    $region3: #{tpu_custom_call.1} parent=1 // pred_check_branch
      %14 = sbr.rel (0) target = $region5
    $region4: #{tpu_custom_call.1} parent=1 // pred_region
      %s16 = ssub.s32 256, 256
      %17 = vsyncadd [#allocation3], %s16
      %s18 = sshll.u32 [#allocation2], 4
      %s19 = int_to_ptr.vmem [resolvable:$true] %s18
      %24 = dma.hbm_to_vmem [thread:$0]  %s0, 256, %s19, [#allocation3], 128, 128, 8
    $region5: #{tpu_custom_call.1} parent=1 // pred_fallthru
      _
    // Predicated region
    $region6: #{tpu_custom_call.1} parent=1 // pred_check
      _
    $region7: #{tpu_custom_call.1} parent=1 // pred_check_branch
      %26 = sbr.rel (0) target = $region9
    $region8: #{tpu_custom_call.1} parent=1 // pred_region
      %s28 = ssub.s32 2048, 2048
      %29 = vsyncadd [#allocation6], %s28
      %s30 = sshll.u32 [#allocation5], 4
      %s31 = int_to_ptr.vmem [resolvable:$true] %s30
      %36 = dma.hbm_to_vmem [thread:$0]  %s1, 2048, %s31, [#allocation6], 128, 128, 8
    $region9: #{tpu_custom_call.1} parent=1 // pred_fallthru
      _
    // Predicated region
    $region10: #{tpu_custom_call.1} parent=1 // pred_check
      _
    $region11: #{tpu_custom_call.1} parent=1 // pred_check_branch
      %38 = sbr.rel (0) target = $region13
    $region12: #{tpu_custom_call.1} parent=1 // pred_region
      _
    $region13: #{tpu_custom_call.1} parent=1 // pred_fallthru
      _
    // Predicated region
    $region14: #{tpu_custom_call.1} parent=1 // pred_check
      _
    $region15: #{tpu_custom_call.1} parent=1 // pred_check_branch
      %40 = sbr.rel (0) target = $region17
    $region16: #{tpu_custom_call.1} parent=1 // pred_region
      %s42 = ssub.s32 2048, 2048
      %43 = vsyncadd [#allocation6], %s42
      %s44 = sshll.u32 [#allocation7], 4
      %s45 = int_to_ptr.vmem [resolvable:$true] %s44
      %50 = dma.hbm_to_vmem [thread:$0]  %s3, 2048, %s45, [#allocation6], 64, 64, 4
    $region17: #{tpu_custom_call.1} parent=1 // pred_fallthru
      _
    // Predicated region
    $region18: #{tpu_custom_call.1} parent=1 // pred_check
      _
    $region19: #{tpu_custom_call.1} parent=1 // pred_check_branch
      %52 = sbr.rel (0) target = $region21
    $region20: #{tpu_custom_call.1} parent=1 // pred_region
      _
    $region21: #{tpu_custom_call.1} parent=1 // pred_fallthru
      _
    // Predicated region
    $region22: #{tpu_custom_call.1} parent=1 // pred_check
      _
    $region23: #{tpu_custom_call.1} parent=1 // pred_check_branch
      %54 = sbr.rel (0) target = $region25
    $region24: #{tpu_custom_call.1} parent=1 // pred_region
      %55 = dma.done [#allocation3], 256
    $region25: #{tpu_custom_call.1} parent=1 // pred_fallthru
      _
    // Predicated region
    $region26: #{tpu_custom_call.1} parent=1 // pred_check
      _
    $region27: #{tpu_custom_call.1} parent=1 // pred_check_branch
      %57 = sbr.rel (0) target = $region29
    $region28: #{tpu_custom_call.1} parent=1 // pred_region
      %58 = dma.done [#allocation6], 2048
    $region29: #{tpu_custom_call.1} parent=1 // pred_fallthru
      _
    // Predicated region
    $region30: #{tpu_custom_call.1} parent=1 // pred_check
      _
    $region31: #{tpu_custom_call.1} parent=1 // pred_check_branch
      %60 = sbr.rel (0) target = $region33
    $region32: #{tpu_custom_call.1} parent=1 // pred_region
      %61 = dma.done [#allocation6], 2048
    $region33: #{tpu_custom_call.1} parent=1 // pred_fallthru
      _
    %v63 = vld [vmem:[#allocation2] sm:$0xff]
    %v64 = vld [vmem:[#allocation2 + $0x8] sm:$0xff]
    %v65 = vpack.c.bf16 %v64, %v63
    %v66 = vld [vmem:[#allocation5] sm:$0xff]
    %v67 = vld [vmem:[#allocation5 + $0x8] sm:$0xff]
    %v68 = vld [vmem:[#allocation5 + $0x10] sm:$0xff]
    %v69 = vld [vmem:[#allocation5 + $0x18] sm:$0xff]
    %v70 = vld [vmem:[#allocation5 + $0x20] sm:$0xff]
    %v71 = vld [vmem:[#allocation5 + $0x28] sm:$0xff]
    %v72 = vld [vmem:[#allocation5 + $0x30] sm:$0xff]
    %v73 = vld [vmem:[#allocation5 + $0x38] sm:$0xff]
    %v74 = vld [vmem:[#allocation5 + $0x40] sm:$0xff]
    %v75 = vld [vmem:[#allocation5 + $0x48] sm:$0xff]
    %v76 = vld [vmem:[#allocation5 + $0x50] sm:$0xff]
    %v77 = vld [vmem:[#allocation5 + $0x58] sm:$0xff]
    %v78 = vld [vmem:[#allocation5 + $0x60] sm:$0xff]
    %v79 = vld [vmem:[#allocation5 + $0x68] sm:$0xff]
    %v80 = vld [vmem:[#allocation5 + $0x70] sm:$0xff]
    %v81 = vld [vmem:[#allocation5 + $0x78] sm:$0xff]
    %v82 = vld [vmem:[%s2] sm:$0x3]
    %v84 = vlaneseq
    %v85 = vshrl.u32 %v84, 7
    %v86 = vsub.s32 0, %v85
    %v87 = vrot.slane %v82, %v86
    %v88 = vlaneseq
    %v89 = vshrl.u32 %v88, 7
    %v90 = vsub.s32 1, %v89
    %v91 = vrot.slane %v82, %v90
    %v110 = vunpack.c.l.b16 %v66
    %v111 = vunpack.c.h.b16 %v66
    %v112 = vunpack.c.l.b16 %v67
    %v113 = vunpack.c.h.b16 %v67
    %v114 = vunpack.c.l.b16 %v68
    %v115 = vunpack.c.h.b16 %v68
    %v116 = vunpack.c.l.b16 %v69
    %v117 = vunpack.c.h.b16 %v69
    %v118 = vunpack.c.l.b16 %v70
    %v119 = vunpack.c.h.b16 %v70
    %v120 = vunpack.c.l.b16 %v71
    %v121 = vunpack.c.h.b16 %v71
    %v122 = vunpack.c.l.b16 %v72
    %v123 = vunpack.c.h.b16 %v72
    %v124 = vunpack.c.l.b16 %v73
    %v125 = vunpack.c.h.b16 %v73
    %v126 = vunpack.c.l.b16 %v74
    %v127 = vunpack.c.h.b16 %v74
    %v128 = vunpack.c.l.b16 %v75
    %v129 = vunpack.c.h.b16 %v75
    %v130 = vunpack.c.l.b16 %v76
    %v131 = vunpack.c.h.b16 %v76
    %v132 = vunpack.c.l.b16 %v77
    %v133 = vunpack.c.h.b16 %v77
    %v134 = vunpack.c.l.b16 %v78
    %v135 = vunpack.c.h.b16 %v78
    %v136 = vunpack.c.l.b16 %v79
    %v137 = vunpack.c.h.b16 %v79
    %v138 = vunpack.c.l.b16 %v80
    %v139 = vunpack.c.h.b16 %v80
    %v140 = vunpack.c.l.b16 %v81
    %v141 = vunpack.c.h.b16 %v81
    %v142 = vpack.c.b16 %v112, %v110
    %v143 = vpack.c.b16 %v113, %v111
    %v144 = vpack.c.b16 %v116, %v114
    %v145 = vpack.c.b16 %v117, %v115
    %v146 = vpack.c.b16 %v120, %v118
    %v147 = vpack.c.b16 %v121, %v119
    %v148 = vpack.c.b16 %v124, %v122
    %v149 = vpack.c.b16 %v125, %v123
    %v150 = vpack.c.b16 %v128, %v126
    %v151 = vpack.c.b16 %v129, %v127
    %v152 = vpack.c.b16 %v132, %v130
    %v153 = vpack.c.b16 %v133, %v131
    %v154 = vpack.c.b16 %v136, %v134
    %v155 = vpack.c.b16 %v137, %v135
    %v156 = vpack.c.b16 %v140, %v138
    %v157 = vpack.c.b16 %v141, %v139
    %174 = vmatprep.subr.bf16.mxu0 %v143
    %175 = vmatpush1.bf16.msra.mxu0 %v142
    %176 = vmatprep.subr.bf16.mxu0 %v145
    %177 = vmatpush1.bf16.msra.mxu0 %v144
    %178 = vmatprep.subr.bf16.mxu0 %v147
    %179 = vmatpush1.bf16.msra.mxu0 %v146
    %180 = vmatprep.subr.bf16.mxu0 %v149
    %181 = vmatpush1.bf16.msra.mxu0 %v148
    %182 = vmatprep.subr.bf16.mxu0 %v151
    %183 = vmatpush1.bf16.msra.mxu0 %v150
    %184 = vmatprep.subr.bf16.mxu0 %v153
    %185 = vmatpush1.bf16.msra.mxu0 %v152
    %186 = vmatprep.subr.bf16.mxu0 %v155
    %187 = vmatpush1.bf16.msra.mxu0 %v154
    %188 = vmatprep.subr.bf16.mxu0 %v157
    %189 = vmatpush1.bf16.msra.mxu0 %v156
    %190 = vmatprep.subr.bf16.mxu0 0
    %191 = vmatpush1.bf16.msra.mxu0 0
    %192 = vmatprep.subr.bf16.mxu0 0
    %193 = vmatpush1.bf16.msra.mxu0 0
    %194 = vmatprep.subr.bf16.mxu0 0
    %195 = vmatpush1.bf16.msra.mxu0 0
    %196 = vmatprep.subr.bf16.mxu0 0
    %197 = vmatpush1.bf16.msra.mxu0 0
    %198 = vmatprep.subr.bf16.mxu0 0
    %199 = vmatpush1.bf16.msra.mxu0 0
    %200 = vmatprep.subr.bf16.mxu0 0
    %201 = vmatpush1.bf16.msra.mxu0 0
    %202 = vmatprep.subr.bf16.mxu0 0
    %203 = vmatpush1.bf16.msra.mxu0 0
    %204 = vmatprep.subr.bf16.mxu0 0
    %205 = vmatpush1.bf16.msra.mxu0 0
    %206 = vmatprep.mubr.bf16.mxu0 0
    %207 = vmatmul.mubr.bf16.gmra.mrb[0].mxu0 %v65
    %v208 = vpop.f32.mrb[0].mxu0
    %v209 = vadd.f32 %v87, %v208
    %v210 = vpop.f32.mrb[0].mxu0
    %v211 = vadd.f32 %v91, %v210
    %v212 = vpop.f32.mrb[0].mxu0
    %v213 = vadd.f32 %v87, %v212
    %v214 = vpop.f32.mrb[0].mxu0
    %v215 = vadd.f32 %v91, %v214
    %216 = vdwg.mxu0
    %v217 = vmul.f32 %v209, 0.5
    %v218 = vmul.f32 %v211, 0.5
    %v219 = vmul.f32 %v213, 0.5
    %v220 = vmul.f32 %v215, 0.5
    %v221 = vmul.f32 %v209, 0.044715
    %v222 = vmul.f32 %v211, 0.044715
    %v223 = vmul.f32 %v213, 0.044715
    %v224 = vmul.f32 %v215, 0.044715
    %v225 = vmul.f32 %v221, %v209
    %v226 = vmul.f32 %v222, %v211
    %v227 = vmul.f32 %v223, %v213
    %v228 = vmul.f32 %v224, %v215
    %v229 = vmul.f32 %v225, %v209
    %v230 = vmul.f32 %v226, %v211
    %v231 = vmul.f32 %v227, %v213
    %v232 = vmul.f32 %v228, %v215
    %v233 = vadd.f32 %v209, %v229
    %v234 = vadd.f32 %v211, %v230
    %v235 = vadd.f32 %v213, %v231
    %v236 = vadd.f32 %v215, %v232
    %v237 = vmul.f32 %v233, 0.7978846
    %v238 = vmul.f32 %v234, 0.7978846
    %v239 = vmul.f32 %v235, 0.7978846
    %v240 = vmul.f32 %v236, 0.7978846
    %v241 = vtanh.pop %v237
    %v242 = vtanh.pop %v238
    %v243 = vtanh.pop %v239
    %v244 = vtanh.pop %v240
    %v245 = vadd.f32 %v241, 1.0
    %v246 = vadd.f32 %v242, 1.0
    %v247 = vadd.f32 %v243, 1.0
    %v248 = vadd.f32 %v244, 1.0
    %v249 = vmul.f32 %v217, %v245
    %v250 = vmul.f32 %v218, %v246
    %v251 = vmul.f32 %v219, %v247
    %v252 = vmul.f32 %v220, %v248
    %v253 = vpack.c.bf16 %v251, %v249
    %v254 = vpack.c.bf16 %v252, %v250
    %v255 = vld [vmem:[#allocation7] sm:$0xf]
    %v256 = vld [vmem:[#allocation7 + $0x4] sm:$0xf]
    %v257 = vld [vmem:[#allocation7 + $0x8] sm:$0xf]
    %v258 = vld [vmem:[#allocation7 + $0xc] sm:$0xf]
    %v259 = vld [vmem:[#allocation7 + $0x10] sm:$0xf]
    %v260 = vld [vmem:[#allocation7 + $0x14] sm:$0xf]
    %v261 = vld [vmem:[#allocation7 + $0x18] sm:$0xf]
    %v262 = vld [vmem:[#allocation7 + $0x1c] sm:$0xf]
    %v263 = vld [vmem:[#allocation7 + $0x20] sm:$0xf]
    %v264 = vld [vmem:[#allocation7 + $0x24] sm:$0xf]
    %v265 = vld [vmem:[#allocation7 + $0x28] sm:$0xf]
    %v266 = vld [vmem:[#allocation7 + $0x2c] sm:$0xf]
    %v267 = vld [vmem:[#allocation7 + $0x30] sm:$0xf]
    %v268 = vld [vmem:[#allocation7 + $0x34] sm:$0xf]
    %v269 = vld [vmem:[#allocation7 + $0x38] sm:$0xf]
    %v270 = vld [vmem:[#allocation7 + $0x3c] sm:$0xf]
    %v271 = vld [vmem:[#allocation7 + $0x40] sm:$0xf]
    %v272 = vld [vmem:[#allocation7 + $0x44] sm:$0xf]
    %v273 = vld [vmem:[#allocation7 + $0x48] sm:$0xf]
    %v274 = vld [vmem:[#allocation7 + $0x4c] sm:$0xf]
    %v275 = vld [vmem:[#allocation7 + $0x50] sm:$0xf]
    %v276 = vld [vmem:[#allocation7 + $0x54] sm:$0xf]
    %v277 = vld [vmem:[#allocation7 + $0x58] sm:$0xf]
    %v278 = vld [vmem:[#allocation7 + $0x5c] sm:$0xf]
    %v279 = vld [vmem:[#allocation7 + $0x60] sm:$0xf]
    %v280 = vld [vmem:[#allocation7 + $0x64] sm:$0xf]
    %v281 = vld [vmem:[#allocation7 + $0x68] sm:$0xf]
    %v282 = vld [vmem:[#allocation7 + $0x6c] sm:$0xf]
    %v283 = vld [vmem:[#allocation7 + $0x70] sm:$0xf]
    %v284 = vld [vmem:[#allocation7 + $0x74] sm:$0xf]
    %v285 = vld [vmem:[#allocation7 + $0x78] sm:$0xf]
    %v286 = vld [vmem:[#allocation7 + $0x7c] sm:$0xf]
    %v287 = vld [vmem:[%s4] sm:$0x1]
    %v289 = vlaneseq
    %v290 = vshrl.u32 %v289, 7
    %v291 = vsub.s32 0, %v290
    %v292 = vrot.slane %v287, %v291
    %v326 = vunpack.c.l.b16 %v255
    %v327 = vunpack.c.l.b16 %v256
    %v328 = vunpack.c.l.b16 %v257
    %v329 = vunpack.c.l.b16 %v258
    %v330 = vunpack.c.l.b16 %v259
    %v331 = vunpack.c.l.b16 %v260
    %v332 = vunpack.c.l.b16 %v261
    %v333 = vunpack.c.l.b16 %v262
    %v334 = vunpack.c.l.b16 %v263
    %v335 = vunpack.c.l.b16 %v264
    %v336 = vunpack.c.l.b16 %v265
    %v337 = vunpack.c.l.b16 %v266
    %v338 = vunpack.c.l.b16 %v267
    %v339 = vunpack.c.l.b16 %v268
    %v340 = vunpack.c.l.b16 %v269
    %v341 = vunpack.c.l.b16 %v270
    %v342 = vunpack.c.l.b16 %v271
    %v343 = vunpack.c.l.b16 %v272
    %v344 = vunpack.c.l.b16 %v273
    %v345 = vunpack.c.l.b16 %v274
    %v346 = vunpack.c.l.b16 %v275
    %v347 = vunpack.c.l.b16 %v276
    %v348 = vunpack.c.l.b16 %v277
    %v349 = vunpack.c.l.b16 %v278
    %v350 = vunpack.c.l.b16 %v279
    %v351 = vunpack.c.l.b16 %v280
    %v352 = vunpack.c.l.b16 %v281
    %v353 = vunpack.c.l.b16 %v282
    %v354 = vunpack.c.l.b16 %v283
    %v355 = vunpack.c.l.b16 %v284
    %v356 = vunpack.c.l.b16 %v285
    %v357 = vunpack.c.l.b16 %v286
    %v358 = vpack.c.b16 %v327, %v326
    %v359 = vpack.c.b16 %v329, %v328
    %v360 = vpack.c.b16 %v331, %v330
    %v361 = vpack.c.b16 %v333, %v332
    %v362 = vpack.c.b16 %v335, %v334
    %v363 = vpack.c.b16 %v337, %v336
    %v364 = vpack.c.b16 %v339, %v338
    %v365 = vpack.c.b16 %v341, %v340
    %v366 = vpack.c.b16 %v343, %v342
    %v367 = vpack.c.b16 %v345, %v344
    %v368 = vpack.c.b16 %v347, %v346
    %v369 = vpack.c.b16 %v349, %v348
    %v370 = vpack.c.b16 %v351, %v350
    %v371 = vpack.c.b16 %v353, %v352
    %v372 = vpack.c.b16 %v355, %v354
    %v373 = vpack.c.b16 %v357, %v356
    %390 = vmatprep.subr.bf16.mxu0 0
    %391 = vmatpush1.bf16.msra.mxu0 %v358
    %392 = vmatprep.subr.bf16.mxu0 0
    %393 = vmatpush1.bf16.msra.mxu0 %v359
    %394 = vmatprep.subr.bf16.mxu0 0
    %395 = vmatpush1.bf16.msra.mxu0 %v360
    %396 = vmatprep.subr.bf16.mxu0 0
    %397 = vmatpush1.bf16.msra.mxu0 %v361
    %398 = vmatprep.subr.bf16.mxu0 0
    %399 = vmatpush1.bf16.msra.mxu0 %v362
    %400 = vmatprep.subr.bf16.mxu0 0
    %401 = vmatpush1.bf16.msra.mxu0 %v363
    %402 = vmatprep.subr.bf16.mxu0 0
    %403 = vmatpush1.bf16.msra.mxu0 %v364
    %404 = vmatprep.subr.bf16.mxu0 0
    %405 = vmatpush1.bf16.msra.mxu0 %v365
    %406 = vmatprep.subr.bf16.mxu0 0
    %407 = vmatpush1.bf16.msra.mxu0 %v366
    %408 = vmatprep.subr.bf16.mxu0 0
    %409 = vmatpush1.bf16.msra.mxu0 %v367
    %410 = vmatprep.subr.bf16.mxu0 0
    %411 = vmatpush1.bf16.msra.mxu0 %v368
    %412 = vmatprep.subr.bf16.mxu0 0
    %413 = vmatpush1.bf16.msra.mxu0 %v369
    %414 = vmatprep.subr.bf16.mxu0 0
    %415 = vmatpush1.bf16.msra.mxu0 %v370
    %416 = vmatprep.subr.bf16.mxu0 0
    %417 = vmatpush1.bf16.msra.mxu0 %v371
    %418 = vmatprep.subr.bf16.mxu0 0
    %419 = vmatpush1.bf16.msra.mxu0 %v372
    %420 = vmatprep.subr.bf16.mxu0 0
    %421 = vmatpush1.bf16.msra.mxu0 %v373
    %422 = vmatprep.mubr.bf16.mxu0 %v254
    %423 = vmatmul.mubr.bf16.gmra.mrb[0].mxu0 %v253
    %v424 = vpop.f32.mrb[0].mxu0
    %v425 = vadd.f32 %v292, %v424
    %v426 = vpop.f32.mrb[0].mxu0
    %v427 = vpop.f32.mrb[0].mxu0
    %v428 = vadd.f32 %v292, %v427
    %v429 = vpop.f32.mrb[0].mxu0
    %430 = vdwg.mxu0
    %v431 = vadd.f32 %v425, %v63
    %v432 = vadd.f32 %v428, %v64
    %433 = vst [vmem:[#allocation8] sm:$0xff] %v431
    %434 = vst [vmem:[#allocation8 + $0x8] sm:$0xff] %v432
    // Predicated region
    $region34: #{tpu_custom_call.1} parent=1 // pred_check
      _
    $region35: #{tpu_custom_call.1} parent=1 // pred_check_branch
      %436 = sbr.rel (0) target = $region37
    $region36: #{tpu_custom_call.1} parent=1 // pred_region
      %s438 = ssub.s32 256, 256
      %439 = vsyncadd [#allocation4], %s438
      %s440 = sshll.u32 [#allocation8], 4
      %s441 = int_to_ptr.vmem [resolvable:$true] %s440
      %446 = dma.vmem_to_hbm [thread:$0]  %s441, 256, %s5, [#allocation4], 128, 128, 8
    $region37: #{tpu_custom_call.1} parent=1 // pred_fallthru
      _
    // Predicated region
    $region38: #{tpu_custom_call.1} parent=1 // pred_check
      _
    $region39: #{tpu_custom_call.1} parent=1 // pred_check_branch
      %448 = sbr.rel (0) target = $region41
    $region40: #{tpu_custom_call.1} parent=1 // pred_region
      %449 = dma.done [#allocation4], 256
    $region41: #{tpu_custom_call.1} parent=1 // pred_fallthru
      _
    %450 = vsyncpa [#allocation3], 1
    %451 = vsyncpa [#allocation6], 1
    %452 = vsyncpa [#allocation4], 1

</llo_original>
